<compile_context>
chip_gen: v7x
topology: tpu7x:2x2x1
jax: 0.10.0
libtpu: 0.0.40
codegen_flags: <defaults>
</compile_context>

<pallas_src>
import functools

import jax
import jax.numpy as jnp
from jax.experimental import pallas as pl
from jax.experimental.pallas import tpu as pltpu

NEG_SLOPE = 0.01  # nn.LeakyReLU default negative_slope
LANES = 128


def _leaky_relu(x):
    return jnp.where(x >= 0, x, NEG_SLOPE * x)


def _round_up(x, m):
    return ((x + m - 1) // m) * m


def _vmem_capacity_bytes():
    """Physical VMEM of the current generation; conservative fallback."""
    try:
        cap = int(pltpu.get_tpu_info().vmem_capacity_bytes)
    except Exception:
        cap = 64 * 1024 * 1024  # assume v7x-sized VMEM if the query fails
    return max(cap, 32 * 1024 * 1024)


def _pick_spatial_tile(spatial, channels, itemsize, vmem_cap):
    """Lane-dense (multiple-of-128) spatial tile sized by a byte budget.

    Target ~4 MiB of x per block (amortizes the ~0.35us per-grid-step cost),
    but keep the two double-buffered x blocks within ~3/8 of physical VMEM
    so the same code is safe on v7x (64 MiB) and v5e/v6e (128 MiB).
    """
    per_block_cap = (vmem_cap * 3) // 16          # 2 buffers -> 3/8 of VMEM total
    target = min(4 * 1024 * 1024, per_block_cap)
    row_bytes = max(1, channels * itemsize)
    ts = (target // row_bytes) // LANES * LANES
    ts = max(LANES, ts)                           # very large C: 128-lane floor
    ts = min(ts, _round_up(spatial, LANES))       # never bigger than needed
    return int(ts)


def _padded_block_bytes(shape, dtype):
    """VMEM footprint of one block, padded to (8, 128) tiles."""
    itemsize = jnp.dtype(dtype).itemsize
    shape = tuple(int(d) for d in shape)
    if len(shape) == 1:
        return _round_up(shape[0] * itemsize, 512)
    lead = 1
    for d in shape[:-2]:
        lead *= d
    return lead * _round_up(shape[-2], 8) * _round_up(shape[-1], LANES) * itemsize


def classifier_kernel(x_ref, w1_ref, b1_ref, w2_ref, b2_ref, o_ref, acc_ref, *,
                      spatial_size, tile_s, needs_mask):
    # grid = (batch, spatial_tile); spatial tile is the reduction axis (last).
    s = pl.program_id(1)

    @pl.when(s == 0)
    def _init():
        acc_ref[...] = jnp.zeros_like(acc_ref)

    channels = acc_ref.shape[0]
    n_chunks = tile_s // LANES

    if needs_mask:
        lane_ids = jax.lax.broadcasted_iota(jnp.int32, (channels, LANES), 1)
        tile_base = s * tile_s

    # Lane-dense partial sum: add 128-lane chunks with plain VPU adds; the
    # running (C, 128) sum stays in vregs, one accumulator update per tile.
    def add_chunk(i, carry):
        off = pl.multiple_of(i * LANES, LANES)
        chunk = x_ref[:, pl.ds(off, LANES)].astype(jnp.float32)   # (C, 128)
        if needs_mask:
            valid = (tile_base + off + lane_ids) < spatial_size
            chunk = jnp.where(valid, chunk, 0.0)
        return carry + chunk

    partial = jax.lax.fori_loop(
        0, n_chunks, add_chunk,
        jnp.zeros((channels, LANES), jnp.float32))
    acc_ref[...] += partial

    # Epilogue: single cross-lane reduce, 1/S scale, fc1 + fc2 on the MXU.
    @pl.when(s == pl.num_programs(1) - 1)
    def _epilogue():
        inv_s = jnp.float32(1.0 / spatial_size)
        pooled = jnp.sum(acc_ref[...], axis=-1, keepdims=True) * inv_s   # (C, 1)

        # (1, C) @ (C, H) expressed by contracting dim 0 of both operands —
        # folds the (C,1)->(1,C) relayout into the matmul itself.
        h = jax.lax.dot_general(
            pooled, w1_ref[...],
            dimension_numbers=(((0,), (0,)), ((), ())),
            preferred_element_type=jnp.float32) + b1_ref[...]            # (1, H)
        h = _leaky_relu(h)

        y = jnp.dot(h, w2_ref[...],
                    preferred_element_type=jnp.float32) + b2_ref[...]    # (1, K)
        y = _leaky_relu(y)

        o_ref[...] = y.reshape(o_ref.shape).astype(o_ref.dtype)


def classifier_forward(x, w1, b1, w2, b2, *, spatial_tile=None):
    """x: (N, C, D, H, W).  w1: (C, 1024) [stored (in, out)], b1: (1024,)/(1,1024),
    w2: (1024, K), b2: (K,)/(1,K).  Returns (N, K) (squeezed on axis 1 iff K==1)."""
    N, C, D, H, W = x.shape
    S = D * H * W
    hidden = w1.shape[1]
    K = w2.shape[1]
    b1 = b1.reshape(1, hidden)
    b2 = b2.reshape(1, K)

    x3 = x.reshape(N, C, S)                 # glue reshape, no data movement
    itemsize = jnp.dtype(x.dtype).itemsize
    vmem_cap = _vmem_capacity_bytes()

    if spatial_tile is None:
        TS = _pick_spatial_tile(S, C, itemsize, vmem_cap)
    else:
        TS = _round_up(int(spatial_tile), LANES)
    n_s = pl.cdiv(S, TS)
    needs_mask = (S % TS) != 0              # masked last tile for ragged S

    # VMEM budget: double-buffered blocks + accumulator + headroom, capped.
    x_block_bytes = _padded_block_bytes((1, C, TS), x.dtype)
    param_bytes = sum(_padded_block_bytes(p.shape, p.dtype)
                      for p in (w1, b1, w2, b2))
    out_bytes = _padded_block_bytes((1, 1, K), x.dtype)
    acc_bytes = _padded_block_bytes((C, LANES), jnp.float32)
    needed = 2 * (x_block_bytes + param_bytes + out_bytes) + acc_bytes
    vmem_limit = int(min(max(2 * needed, 32 * 1024 * 1024),
                         (vmem_cap * 3) // 4))

    cost = pl.CostEstimate(
        flops=int(N * C * S + 2 * N * (C * hidden + hidden * K)),
        transcendentals=0,
        bytes_accessed=int(
            N * C * S * itemsize
            + sum(int(p.size) * jnp.dtype(p.dtype).itemsize
                  for p in (w1, b1, w2, b2))
            + N * K * itemsize),
    )

    kernel = functools.partial(classifier_kernel, spatial_size=S, tile_s=TS,
                               needs_mask=needs_mask)

    out = pl.pallas_call(
        kernel,
        out_shape=jax.ShapeDtypeStruct((N, 1, K), x.dtype),
        grid=(N, n_s),
        in_specs=[
            # (C, TS) lane-dense tile of x (batch dim squeezed), auto-pipelined.
            pl.BlockSpec((pl.Squeezed(), C, TS), lambda b, s: (b, 0, s)),
            # Weights/biases: full-array blocks, resident across the grid.
            pl.BlockSpec(w1.shape, lambda b, s: (0, 0)),
            pl.BlockSpec(b1.shape, lambda b, s: (0, 0)),
            pl.BlockSpec(w2.shape, lambda b, s: (0, 0)),
            pl.BlockSpec(b2.shape, lambda b, s: (0, 0)),
        ],
        out_specs=pl.BlockSpec((1, 1, K), lambda b, s: (b, 0, 0)),
        scratch_shapes=[pltpu.VMEM((C, LANES), jnp.float32)],   # pooled-sum acc
        compiler_params=pltpu.CompilerParams(
            dimension_semantics=("parallel", "arbitrary"),
            vmem_limit_bytes=vmem_limit,
        ),
        cost_estimate=cost,
    )(x3, w1, b1, w2, b2)

    out = out.reshape(N, K)
    if K == 1:                               # torch .squeeze(1)
        out = jnp.squeeze(out, axis=1)
    return out


def reference_forward(x, w1, b1, w2, b2):
    pooled = jnp.mean(x.astype(jnp.float32), axis=(2, 3, 4))            # (N, C)
    h = _leaky_relu(pooled @ w1 + b1.reshape(1, -1))
    y = _leaky_relu(h @ w2 + b2.reshape(1, -1))
    if y.shape[1] == 1:
        y = jnp.squeeze(y, axis=1)
    return y.astype(x.dtype)


if __name__ == "__main__":
    # Small, module-consistent shapes (features = C, hidden fixed at 1024).
    N, C, D, H, W = 2, 32, 4, 8, 8          # S = 256
    HIDDEN = 1024
    NUM_CLASSES = 10

    key = jax.random.PRNGKey(0)
    kx, kw1, kb1, kw2, kb2, kx2 = jax.random.split(key, 6)

    x = jax.random.normal(kx, (N, C, D, H, W), dtype=jnp.float32)
    # Weights stored transposed ((in, out)) relative to torch's (out, in).
    w1 = jax.random.normal(kw1, (C, HIDDEN), dtype=jnp.float32) * (C ** -0.5)
    b1 = jax.random.normal(kb1, (1, HIDDEN), dtype=jnp.float32) * 0.01
    w2 = jax.random.normal(kw2, (HIDDEN, NUM_CLASSES), dtype=jnp.float32) * (HIDDEN ** -0.5)
    b2 = jax.random.normal(kb2, (1, NUM_CLASSES), dtype=jnp.float32) * 0.01

    ref = jax.block_until_ready(reference_forward(x, w1, b1, w2, b2))

    # 1) Default (byte-budgeted) tile: single spatial step here.
    out = jax.block_until_ready(classifier_forward(x, w1, b1, w2, b2))
    assert out.shape == (N, NUM_CLASSES), out.shape
    assert jnp.allclose(out, ref, atol=2e-4, rtol=2e-4), "mismatch (auto tile)"

    # 2) Forced small tile: exercises the multi-step accumulation path.
    out_small = jax.block_until_ready(
        classifier_forward(x, w1, b1, w2, b2, spatial_tile=128))
    assert jnp.allclose(out_small, ref, atol=2e-4, rtol=2e-4), "mismatch (tiled)"

    # 3) Ragged spatial extent (masked last tile) + num_classes == 1 squeeze.
    x_odd = jax.random.normal(kx2, (1, C, 3, 5, 7), dtype=jnp.float32)   # S = 105
    w2_1 = w2[:, :1]
    b2_1 = b2[:, :1]
    ref_odd = jax.block_until_ready(reference_forward(x_odd, w1, b1, w2_1, b2_1))
    out_odd = jax.block_until_ready(classifier_forward(x_odd, w1, b1, w2_1, b2_1))
    assert out_odd.shape == (1,), out_odd.shape
    assert jnp.allclose(out_odd, ref_odd, atol=2e-4, rtol=2e-4), "mismatch (masked)"

    print("KERNEL_OK")
</pallas_src>

<mosaic_0001>
module attributes {stable_mosaic.version = 11 : i64} {
  func.func @classifier_kernel(%arg0: i32, %arg1: i32, %arg2: memref<1x32x256xf32, #tpu.memory_space<vmem>>, %arg3: memref<32x1024xf32, #tpu.memory_space<vmem>>, %arg4: memref<1x1024xf32, #tpu.memory_space<vmem>>, %arg5: memref<1024x10xf32, #tpu.memory_space<vmem>>, %arg6: memref<1x10xf32, #tpu.memory_space<vmem>>, %arg7: memref<1x1x10xf32, #tpu.memory_space<vmem>>, %arg8: memref<32x128xf32, #tpu.memory_space<vmem>>) attributes {dimension_semantics = [#tpu.dimension_semantics<parallel>, #tpu.dimension_semantics<arbitrary>], iteration_bounds = array<i64: 2, 1>, scalar_prefetch = 0 : i64, scratch_operands = 1 : i64, tpu.core_type = #tpu.core_type<tc>, window_params = [{transform_indices = @transform_0, window_bounds = array<i64: 1, 32, 256>}, {pipeline_mode = #tpu.pipeline_mode<synchronous>, transform_indices = @transform_1, window_bounds = array<i64: 32, 1024>}, {pipeline_mode = #tpu.pipeline_mode<synchronous>, transform_indices = @transform_2, window_bounds = array<i64: 1, 1024>}, {pipeline_mode = #tpu.pipeline_mode<synchronous>, transform_indices = @transform_3, window_bounds = array<i64: 1024, 10>}, {pipeline_mode = #tpu.pipeline_mode<synchronous>, transform_indices = @transform_4, window_bounds = array<i64: 1, 10>}, {transform_indices = @transform_5, window_bounds = array<i64: 1, 1, 10>}]} {
    %c0_i32 = arith.constant 0 : i32
    %0 = arith.cmpi eq, %arg1, %c0_i32 : i32
    %1 = arith.extui %0 : i1 to i32
    %c0_i32_0 = arith.constant 0 : i32
    %2 = arith.cmpi ne, %1, %c0_i32_0 : i32
    scf.if %2 {
      %cst_8 = arith.constant 0.000000e+00 : f32
      %12 = vector.broadcast %cst_8 : f32 to vector<32x128xf32>
      %c0_9 = arith.constant 0 : index
      %c0_10 = arith.constant 0 : index
      %13 = vector.load %arg8[%c0_9, %c0_10] : memref<32x128xf32, #tpu.memory_space<vmem>>, vector<32x128xf32>
      tpu.vector_store %arg8[%c0_9, %c0_10], %12 {strides = array<i32>} : memref<32x128xf32, #tpu.memory_space<vmem>>, vector<32x128xf32>,
    } else {
    }
    %cst = arith.constant 0.000000e+00 : f32
    %3 = vector.broadcast %cst : f32 to vector<32x128xf32>
    %c0_i32_1 = arith.constant 0 : i32
    %c2_i32 = arith.constant 2 : i32
    %4 = arith.addi %c0_i32_1, %c2_i32 : i32
    %c1_i32 = arith.constant 1 : i32
    %5 = scf.for %arg9 = %c0_i32_1 to %4 step %c1_i32 iter_args(%arg10 = %3) -> (vector<32x128xf32>)  : i32 {
      %c128_i32 = arith.constant 128 : i32
      %12 = arith.muli %arg9, %c128_i32 : i32
      %13 = tpu.assume_multiple %12, 128 : i32
      %c0_8 = arith.constant 0 : index
      %c0_9 = arith.constant 0 : index
      %14 = arith.index_cast %13 : i32 to index
      %15 = vector.load %arg2[%c0_8, %c0_9, %14] : memref<1x32x256xf32, #tpu.memory_space<vmem>>, vector<1x32x128xf32>
      %16 = vector.shape_cast %15 : vector<1x32x128xf32> to vector<32x128xf32>
      %17 = arith.addf %arg10, %16 : vector<32x128xf32>
      scf.yield %17 : vector<32x128xf32>
    }
    %c2_i32_2 = arith.constant 2 : i32
    %c0 = arith.constant 0 : index
    %c0_3 = arith.constant 0 : index
    %6 = vector.load %arg8[%c0, %c0_3] : memref<32x128xf32, #tpu.memory_space<vmem>>, vector<32x128xf32>
    %7 = arith.addf %6, %5 : vector<32x128xf32>
    %c0_4 = arith.constant 0 : index
    %c0_5 = arith.constant 0 : index
    %8 = vector.load %arg8[%c0_4, %c0_5] : memref<32x128xf32, #tpu.memory_space<vmem>>, vector<32x128xf32>
    tpu.vector_store %arg8[%c0_4, %c0_5], %7 {strides = array<i32>} : memref<32x128xf32, #tpu.memory_space<vmem>>, vector<32x128xf32>,
    %c0_i32_6 = arith.constant 0 : i32
    %9 = arith.cmpi eq, %arg1, %c0_i32_6 : i32
    %10 = arith.extui %9 : i1 to i32
    %c0_i32_7 = arith.constant 0 : i32
    %11 = arith.cmpi ne, %10, %c0_i32_7 : i32
    scf.if %11 {
      %c0_8 = arith.constant 0 : index
      %c0_9 = arith.constant 0 : index
      %12 = vector.load %arg8[%c0_8, %c0_9] : memref<32x128xf32, #tpu.memory_space<vmem>>, vector<32x128xf32>
      %cst_10 = arith.constant dense<0.000000e+00> : vector<32xf32>
      %13 = vector.multi_reduction <add>, %12, %cst_10 [1] : vector<32x128xf32> to vector<32xf32>
      %14 = vector.shape_cast %13 : vector<32xf32> to vector<32x1xf32>
      %cst_11 = arith.constant 3.906250e-03 : f32
      %15 = vector.broadcast %cst_11 : f32 to vector<32x1xf32>
      %16 = arith.mulf %14, %15 : vector<32x1xf32>
      %c0_12 = arith.constant 0 : index
      %c0_13 = arith.constant 0 : index
      %17 = vector.load %arg3[%c0_12, %c0_13] : memref<32x1024xf32, #tpu.memory_space<vmem>>, vector<32x1024xf32>
      %cst_14 = arith.constant dense<0.000000e+00> : vector<1x1024xf32>
      %18 = tpu.matmul %16, %17, %cst_14 {dimension_numbers = #tpu.dot_dimension_numbers<[0], [0], [1], [1], [0, 1, 1, 1], [], []>} : vector<32x1xf32>, vector<32x1024xf32>, vector<1x1024xf32> -> vector<1x1024xf32>
      %c0_15 = arith.constant 0 : index
      %c0_16 = arith.constant 0 : index
      %19 = vector.load %arg4[%c0_15, %c0_16] : memref<1x1024xf32, #tpu.memory_space<vmem>>, vector<1x1024xf32>
      %20 = arith.addf %18, %19 : vector<1x1024xf32>
      %cst_17 = arith.constant 0.000000e+00 : f32
      %21 = vector.broadcast %cst_17 : f32 to vector<1x1024xf32>
      %22 = arith.cmpf oge, %20, %21 : vector<1x1024xf32>
      %cst_18 = arith.constant 0.00999999977 : f32
      %23 = vector.broadcast %cst_18 : f32 to vector<1x1024xf32>
      %24 = arith.mulf %23, %20 : vector<1x1024xf32>
      %25 = arith.select %22, %20, %24 : vector<1x1024xi1>, vector<1x1024xf32>
      %c0_19 = arith.constant 0 : index
      %c0_20 = arith.constant 0 : index
      %26 = vector.load %arg5[%c0_19, %c0_20] : memref<1024x10xf32, #tpu.memory_space<vmem>>, vector<1024x10xf32>
      %cst_21 = arith.constant dense<0.000000e+00> : vector<1x10xf32>
      %27 = tpu.matmul %25, %26, %cst_21 {dimension_numbers = #tpu.dot_dimension_numbers<[1], [0], [0], [1], [0, 0, 1, 1], [], []>} : vector<1x1024xf32>, vector<1024x10xf32>, vector<1x10xf32> -> vector<1x10xf32>
      %c0_22 = arith.constant 0 : index
      %c0_23 = arith.constant 0 : index
      %28 = vector.load %arg6[%c0_22, %c0_23] : memref<1x10xf32, #tpu.memory_space<vmem>>, vector<1x10xf32>
      %29 = arith.addf %27, %28 : vector<1x10xf32>
      %cst_24 = arith.constant 0.000000e+00 : f32
      %30 = vector.broadcast %cst_24 : f32 to vector<1x10xf32>
      %31 = arith.cmpf oge, %29, %30 : vector<1x10xf32>
      %cst_25 = arith.constant 0.00999999977 : f32
      %32 = vector.broadcast %cst_25 : f32 to vector<1x10xf32>
      %33 = arith.mulf %32, %29 : vector<1x10xf32>
      %34 = arith.select %31, %29, %33 : vector<1x10xi1>, vector<1x10xf32>
      %35 = vector.shape_cast %34 : vector<1x10xf32> to vector<1x1x10xf32>
      %c0_26 = arith.constant 0 : index
      %c0_27 = arith.constant 0 : index
      %c0_28 = arith.constant 0 : index
      %36 = vector.load %arg7[%c0_26, %c0_27, %c0_28] : memref<1x1x10xf32, #tpu.memory_space<vmem>>, vector<1x1x10xf32>
      tpu.vector_store %arg7[%c0_26, %c0_27, %c0_28], %35 {strides = array<i32>} : memref<1x1x10xf32, #tpu.memory_space<vmem>>, vector<1x1x10xf32>,
    } else {
    }
    return
  }
  func.func @transform_0(%arg0: i32, %arg1: i32) -> (i32, i32, i32) {
    %c0_i32 = arith.constant 0 : i32
    %c0_i32_0 = arith.constant 0 : i32
    return %arg0, %c0_i32, %arg1 : i32, i32, i32
  }
  func.func @transform_1(%arg0: i32, %arg1: i32) -> (i32, i32) {
    %c0_i32 = arith.constant 0 : i32
    %c0_i32_0 = arith.constant 0 : i32
    %c0_i32_1 = arith.constant 0 : i32
    return %c0_i32, %c0_i32_0 : i32, i32
  }
  func.func @transform_2(%arg0: i32, %arg1: i32) -> (i32, i32) {
    %c0_i32 = arith.constant 0 : i32
    %c0_i32_0 = arith.constant 0 : i32
    %c0_i32_1 = arith.constant 0 : i32
    return %c0_i32, %c0_i32_0 : i32, i32
  }
  func.func @transform_3(%arg0: i32, %arg1: i32) -> (i32, i32) {
    %c0_i32 = arith.constant 0 : i32
    %c0_i32_0 = arith.constant 0 : i32
    %c0_i32_1 = arith.constant 0 : i32
    return %c0_i32, %c0_i32_0 : i32, i32
  }
  func.func @transform_4(%arg0: i32, %arg1: i32) -> (i32, i32) {
    %c0_i32 = arith.constant 0 : i32
    %c0_i32_0 = arith.constant 0 : i32
    %c0_i32_1 = arith.constant 0 : i32
    return %c0_i32, %c0_i32_0 : i32, i32
  }
  func.func @transform_5(%arg0: i32, %arg1: i32) -> (i32, i32, i32) {
    %c0_i32 = arith.constant 0 : i32
    %c0_i32_0 = arith.constant 0 : i32
    %c0_i32_1 = arith.constant 0 : i32
    return %arg0, %c0_i32, %c0_i32_0 : i32, i32, i32
  }
}

</mosaic_0001>

<llo_original>
// kernel: tpu_custom_call.1
$region0: #{tpu_custom_call.1}
  #allocation0 [shape = 'u32[]', space=smem, size = 0x4, offset = 0x4, fixed_abs, tag = 'smem constant byte address 0x4 - core index']
  #allocation1 [shape = 'u32[144,128]{1,0:T(1,128)}', space=vmem, size = 0x12000, scoped, tag = 'internal scratch']
  #allocation2 [shape = 'f32[32,128]{1,0:T(8,128)}', space=vmem, size = 0x4000, scoped, tag = 'scratch operand']
  %s0 = inlined_call_operand.vmem [shape: f32[2,32,256], index: 0, kind: input, shape index: {}]
  %s1 = inlined_call_operand.vmem [shape: f32[32,1024], index: 1, kind: input, shape index: {}]
  %s2 = inlined_call_operand.vmem [shape: f32[1,1024], index: 2, kind: input, shape index: {}]
  %s3 = inlined_call_operand.vmem [shape: f32[1024,10], index: 3, kind: input, shape index: {}]
  %s4 = inlined_call_operand.vmem [shape: f32[1,10], index: 4, kind: input, shape index: {}]
  %s5 = inlined_call_operand.hbm [shape: f32[2,1,10], index: 5, kind: output, shape index: {}]
  %s6 = sld [smem:[#allocation0]]
  $region68: #{tpu_custom_call.1} parent=0
    _
  %s8 = ssub.s32 1, %s6
  %s9 = scalar_select 0, %s8, %s6
  $region1: #{tpu_custom_call.1} parent=0
    #allocation3 [shape = 'u8[1024]{0}', space=vmem, size = 0x400, scoped, tag = 'output window, operand 0']
    #allocation4 [shape = 's32[2]{0}', space=sflag, size = 0x8, scoped, tag = 'scoped memory for tpu_custom_call.1']
    %10 = vsyncpa [#allocation4], 0
    %s11 = scalar_lea.sflag [#allocation4], 1
    %12 = vsyncpa %s11, 0
    loop: start=0, step=1, limit=4
    $region2: #{tpu_custom_call.1} parent=1 // loop_pre_header
      _
    $region3: #{tpu_custom_call.1} parent=1 // loop_header
      %s14 = sphi 0, %s18
      %p15 = scmp.ge.s32.totalorder %s14, 4
      %s21 = sphi 0, %s33
      %s22 = sphi 0, %s29
      %s23 = sphi 0, %s21
      %s24 = sphi 0, %s22
      %s25 = sphi 0, %s23
      %s26 = sphi 0, %s24
      %s38 = sphi 0, %s40
      %s41 = sphi 0, %s38
      %s42 = sphi 0, %s41
      %s58 = sphi 0, %s42
      %s62 = sphi 0, %s62
      %s64 = sphi 0, %s62
      %s65 = sphi 0, %s64
      %s79 = sphi 0, %s65
      %s83 = sphi 0, %s83
      %s85 = sphi 0, %s83
      %s86 = sphi 0, %s85
      %s100 = sphi 0, %s86
      %s104 = sphi 0, %s104
      %s106 = sphi 0, %s104
      %s107 = sphi 0, %s106
      %s121 = sphi 0, %s107
      %s125 = sphi 0, %s125
      %s127 = sphi 0, %s125
      %s128 = sphi 0, %s127
      %s142 = sphi 0, %s128
      %s148 = sphi 0, %s150
      %s151 = sphi 0, %s148
      %s152 = sphi 0, %s151
      %s168 = sphi 0, %s152
    $region4: #{tpu_custom_call.1} parent=1 // loop_header_branch
      %17 = sbr.rel (%p15) target = $region8
    $region5: #{tpu_custom_call.1} parent=1 // loop_body
      %s19 = ssub.s32 %s14, 1
      %s20 = ssub.s32 %s14, 2
      %s27 = sadd.s32 1, %s22
      %p28 = scmp.ge.s32.totalorder %s27, 1
      %s29 = scalar_select %p28, 0, %s27
      %s30 = sadd.s32 1, %s21
      %s31 = scalar_select %p28, %s30, %s21
      %p32 = scmp.ge.s32.totalorder %s31, 2
      %s33 = scalar_select %p32, 0, %s31
      %s34 = ssub.s32 %s21, %s33
      %s35 = ssub.s32 %s22, %s29
      %s36 = sor.u32 %s34, %s35
      %p37 = scmp.eq.s32.totalorder %s36, 0
      %s39 = sadd.s32 %s38, 1
      %s40 = scalar_select %p37, %s38, %s39
      %p43 = pneg %p37
      %p44 = scmp.eq.s32.totalorder %s14, 1
      %p45 = por %p43, %p44
      %p46 = scmp.ne.s32.totalorder %s38, %s41
      %p47 = scmp.eq.s32.totalorder %s14, 0
      %p48 = por %p46, %p47
      %p49 = scmp.ne.s32.totalorder %s38, %s41
      %p50 = scmp.eq.s32.totalorder %s19, 1
      %p51 = por %p49, %p50
      %p52 = scmp.ne.s32.totalorder %s41, %s42
      %p53 = scmp.eq.s32.totalorder %s19, 0
      %p54 = por %p52, %p53
      %p55 = scmp.ne.s32.totalorder %s41, %s42
      %p56 = scmp.eq.s32.totalorder %s20, 1
      %p57 = por %p55, %p56
      %p59 = scmp.ne.s32.totalorder %s42, %s58
      %p60 = scmp.eq.s32.totalorder %s20, 0
      %p61 = por %p59, %p60
      %s63 = sadd.s32 %s62, 1
      %p66 = scmp.eq.s32.totalorder %s14, 1
      %p67 = scmp.ne.s32.totalorder %s62, %s64
      %p68 = scmp.eq.s32.totalorder %s14, 0
      %p69 = por %p67, %p68
      %p70 = scmp.ne.s32.totalorder %s62, %s64
      %p71 = scmp.eq.s32.totalorder %s19, 1
      %p72 = por %p70, %p71
      %p73 = scmp.ne.s32.totalorder %s64, %s65
      %p74 = scmp.eq.s32.totalorder %s19, 0
      %p75 = por %p73, %p74
      %p76 = scmp.ne.s32.totalorder %s64, %s65
      %p77 = scmp.eq.s32.totalorder %s20, 1
      %p78 = por %p76, %p77
      %p80 = scmp.ne.s32.totalorder %s65, %s79
      %p81 = scmp.eq.s32.totalorder %s20, 0
      %p82 = por %p80, %p81
      %s84 = sadd.s32 %s83, 1
      %p87 = scmp.eq.s32.totalorder %s14, 1
      %p88 = scmp.ne.s32.totalorder %s83, %s85
      %p89 = scmp.eq.s32.totalorder %s14, 0
      %p90 = por %p88, %p89
      %p91 = scmp.ne.s32.totalorder %s83, %s85
      %p92 = scmp.eq.s32.totalorder %s19, 1
      %p93 = por %p91, %p92
      %p94 = scmp.ne.s32.totalorder %s85, %s86
      %p95 = scmp.eq.s32.totalorder %s19, 0
      %p96 = por %p94, %p95
      %p97 = scmp.ne.s32.totalorder %s85, %s86
      %p98 = scmp.eq.s32.totalorder %s20, 1
      %p99 = por %p97, %p98
      %p101 = scmp.ne.s32.totalorder %s86, %s100
      %p102 = scmp.eq.s32.totalorder %s20, 0
      %p103 = por %p101, %p102
      %s105 = sadd.s32 %s104, 1
      %p108 = scmp.eq.s32.totalorder %s14, 1
      %p109 = scmp.ne.s32.totalorder %s104, %s106
      %p110 = scmp.eq.s32.totalorder %s14, 0
      %p111 = por %p109, %p110
      %p112 = scmp.ne.s32.totalorder %s104, %s106
      %p113 = scmp.eq.s32.totalorder %s19, 1
      %p114 = por %p112, %p113
      %p115 = scmp.ne.s32.totalorder %s106, %s107
      %p116 = scmp.eq.s32.totalorder %s19, 0
      %p117 = por %p115, %p116
      %p118 = scmp.ne.s32.totalorder %s106, %s107
      %p119 = scmp.eq.s32.totalorder %s20, 1
      %p120 = por %p118, %p119
      %p122 = scmp.ne.s32.totalorder %s107, %s121
      %p123 = scmp.eq.s32.totalorder %s20, 0
      %p124 = por %p122, %p123
      %s126 = sadd.s32 %s125, 1
      %p129 = scmp.eq.s32.totalorder %s14, 1
      %p130 = scmp.ne.s32.totalorder %s125, %s127
      %p131 = scmp.eq.s32.totalorder %s14, 0
      %p132 = por %p130, %p131
      %p133 = scmp.ne.s32.totalorder %s125, %s127
      %p134 = scmp.eq.s32.totalorder %s19, 1
      %p135 = por %p133, %p134
      %p136 = scmp.ne.s32.totalorder %s127, %s128
      %p137 = scmp.eq.s32.totalorder %s19, 0
      %p138 = por %p136, %p137
      %p139 = scmp.ne.s32.totalorder %s127, %s128
      %p140 = scmp.eq.s32.totalorder %s20, 1
      %p141 = por %p139, %p140
      %p143 = scmp.ne.s32.totalorder %s128, %s142
      %p144 = scmp.eq.s32.totalorder %s20, 0
      %p145 = por %p143, %p144
      %s146 = ssub.s32 %s21, %s33
      %p147 = scmp.eq.s32.totalorder %s146, 0
      %s149 = sadd.s32 %s148, 1
      %s150 = scalar_select %p147, %s148, %s149
      %p153 = pneg %p147
      %p154 = scmp.eq.s32.totalorder %s14, 1
      %p155 = por %p153, %p154
      %p156 = scmp.ne.s32.totalorder %s148, %s151
      %p157 = scmp.eq.s32.totalorder %s14, 0
      %p158 = por %p156, %p157
      %p159 = scmp.ne.s32.totalorder %s148, %s151
      %p160 = scmp.eq.s32.totalorder %s19, 1
      %p161 = por %p159, %p160
      %p162 = scmp.ne.s32.totalorder %s151, %s152
      %p163 = scmp.eq.s32.totalorder %s19, 0
      %p164 = por %p162, %p163
      %p165 = scmp.ne.s32.totalorder %s151, %s152
      %p166 = scmp.eq.s32.totalorder %s20, 1
      %p167 = por %p165, %p166
      %p169 = scmp.ne.s32.totalorder %s152, %s168
      %p170 = scmp.eq.s32.totalorder %s20, 0
      %p171 = por %p169, %p170
      %p172 = scmp.le.s32.totalorder 1, %s14
      %p173 = scmp.lt.s32.totalorder %s14, 3
      %p174 = pnand %p172, %p173
      %p175 = pneg %p174
      // Predicated region
      $region9: #{tpu_custom_call.1} parent=5 // pred_check
        _
      $region10: #{tpu_custom_call.1} parent=5 // pred_check_branch
        %177 = sbr.rel (%p174) target = $region12
      $region11: #{tpu_custom_call.1} parent=5 // pred_region
        %s178 = ssub.s32 %s14, 1
        // Predicated region
        $region13: #{tpu_custom_call.1} parent=11 // pred_check
          %p179 = pneg %p75
        $region14: #{tpu_custom_call.1} parent=11 // pred_check_branch
          %181 = sbr.rel (%p179) target = $region16
        $region15: #{tpu_custom_call.1} parent=11 // pred_region
          _
        $region16: #{tpu_custom_call.1} parent=11 // pred_fallthru
          _
        // Predicated region
        $region17: #{tpu_custom_call.1} parent=11 // pred_check
          %p182 = pneg %p96
        $region18: #{tpu_custom_call.1} parent=11 // pred_check_branch
          %184 = sbr.rel (%p182) target = $region20
        $region19: #{tpu_custom_call.1} parent=11 // pred_region
          _
        $region20: #{tpu_custom_call.1} parent=11 // pred_fallthru
          _
        // Predicated region
        $region21: #{tpu_custom_call.1} parent=11 // pred_check
          %p185 = pneg %p117
        $region22: #{tpu_custom_call.1} parent=11 // pred_check_branch
          %187 = sbr.rel (%p185) target = $region24
        $region23: #{tpu_custom_call.1} parent=11 // pred_region
          _
        $region24: #{tpu_custom_call.1} parent=11 // pred_fallthru
          _
        // Predicated region
        $region25: #{tpu_custom_call.1} parent=11 // pred_check
          %p188 = pneg %p138
        $region26: #{tpu_custom_call.1} parent=11 // pred_check_branch
          %190 = sbr.rel (%p188) target = $region28
        $region27: #{tpu_custom_call.1} parent=11 // pred_region
          _
        $region28: #{tpu_custom_call.1} parent=11 // pred_fallthru
          _
      $region12: #{tpu_custom_call.1} parent=5 // pred_fallthru
        _
      %p191 = scmp.lt.s32.totalorder %s14, 2
      // Predicated region
      $region29: #{tpu_custom_call.1} parent=5 // pred_check
        %p192 = pneg %p191
      $region30: #{tpu_custom_call.1} parent=5 // pred_check_branch
        %194 = sbr.rel (%p192) target = $region32
      $region31: #{tpu_custom_call.1} parent=5 // pred_region
        // Predicated region
        $region33: #{tpu_custom_call.1} parent=31 // pred_check
          %p195 = pneg %p48
        $region34: #{tpu_custom_call.1} parent=31 // pred_check_branch
          %197 = sbr.rel (%p195) target = $region36
        $region35: #{tpu_custom_call.1} parent=31 // pred_region
          %s198 = smul.u32 2, %s22
          %p199 = scmp.lt.s32.totalorder %s21, 1
          %s200 = scalar_select %p199, %s21, 1
          %p201 = scmp.lt.s32.totalorder %s198, 1
          %s202 = scalar_select %p201, %s198, 1
          %s203 = smul.addr %s200, 8
          %s204 = sadd.s32 %s202, %s203
          %s205 = smul.addr %s204, 8
          %s206 = scalar_lea.vmem %s0, %s205
          %s207 = smul.u32 2, %s22
        $region36: #{tpu_custom_call.1} parent=31 // pred_fallthru
          _
      $region32: #{tpu_custom_call.1} parent=5 // pred_fallthru
        _
      %p208 = scmp.le.s32.totalorder 1, %s14
      %p209 = scmp.lt.s32.totalorder %s14, 3
      %p210 = pnand %p208, %p209
      %p211 = pneg %p210
      // Predicated region
      $region37: #{tpu_custom_call.1} parent=5 // pred_check
        _
      $region38: #{tpu_custom_call.1} parent=5 // pred_check_branch
        %213 = sbr.rel (%p210) target = $region40
      $region39: #{tpu_custom_call.1} parent=5 // pred_region
        %s214 = ssub.s32 %s14, 1
        %s215 = smul.u32 2, %s24
        %p216 = scmp.lt.s32.totalorder %s23, 1
        %s217 = scalar_select %p216, %s23, 1
        %p218 = scmp.lt.s32.totalorder %s215, 1
        %s219 = scalar_select %p218, %s215, 1
        %s220 = smul.addr %s217, 8
        %s221 = sadd.s32 %s219, %s220
        %s222 = smul.addr %s221, 8
        %s223 = scalar_lea.vmem %s0, %s222
        %p224 = pneg %p54
        %p225 = pneg %p51
        %p226 = pneg %p75
        %p227 = pneg %p72
        %p228 = pneg %p96
        %p229 = pneg %p93
        %p230 = pneg %p117
        %p231 = pneg %p114
        %p232 = pneg %p138
        %p233 = pneg %p135
        %p234 = pneg %p164
        %p235 = pneg %p161
        %s236 = sand.u32 %s151, 1
        %s237 = scalar_lea.sflag [#allocation4], %s236
        %s238 = sand.u32 %s151, 1
        %s239 = scalar_lea.vmem [#allocation3], %s238
        %s240 = smul.u32 2, %s24
        %p241 = scmp.lt.s32.totalorder %s23, 1
        %s242 = scalar_select %p241, %s23, 1
        %p243 = scmp.lt.s32.totalorder %s240, 1
        %s244 = scalar_select %p243, %s240, 1
        %s245 = smul.addr %s242, 8
        %s246 = sadd.s32 %s244, %s245
        %s247 = smul.addr %s246, 8
        %s248 = scalar_lea.vmem %s0, %s247
        %s249 = smul.u32 2, %s24
        %p250 = scmp.eq.s32.totalorder %s24, 0
        // Predicated region
        $region41: #{tpu_custom_call.1} parent=39 // pred_check
          %p251 = pneg %p250
        $region42: #{tpu_custom_call.1} parent=39 // pred_check_branch
          %253 = sbr.rel (%p251) target = $region44
        $region43: #{tpu_custom_call.1} parent=39 // pred_region
          %254 = vst [vmem:[#allocation2] sm:$0xff] 0.0
          %255 = vst [vmem:[#allocation2 + $0x8] sm:$0xff] 0.0
          %256 = vst [vmem:[#allocation2 + $0x10] sm:$0xff] 0.0
          %257 = vst [vmem:[#allocation2 + $0x18] sm:$0xff] 0.0
        $region44: #{tpu_custom_call.1} parent=39 // pred_fallthru
          _
        loop: start=0, step=1, limit=2
        $region45: #{tpu_custom_call.1} parent=39 // loop_pre_header
          _
        $region46: #{tpu_custom_call.1} parent=39 // loop_header
          %s259 = sphi 0, %s263
          %p260 = scmp.ge.s32.totalorder %s259, 2
          %v264 = vphi 0.0, %v277
          %v265 = vphi 0.0, %v278
          %v266 = vphi 0.0, %v279
          %v267 = vphi 0.0, %v280
        $region47: #{tpu_custom_call.1} parent=39 // loop_header_branch
          %262 = sbr.rel (%p260) target = $region51
        $region48: #{tpu_custom_call.1} parent=39 // loop_body
          %s268 = smul.u32 %s259, 128
          %s269 = sshra.s32 %s268, 7
          %s270 = sand.u32 %s268, 127
          %s271 = smul.addr %s269, 8
          %s272 = scalar_lea.vmem %s248, %s271
          %v273 = vld [vmem:[%s272] sm:$0xff]
          %v274 = vld [vmem:[%s272 + $0x10] sm:$0xff]
          %v275 = vld [vmem:[%s272 + $0x20] sm:$0xff]
          %v276 = vld [vmem:[%s272 + $0x30] sm:$0xff]
          %v277 = vadd.f32 %v264, %v273
          %v278 = vadd.f32 %v265, %v274
          %v279 = vadd.f32 %v266, %v275
          %v280 = vadd.f32 %v267, %v276
        $region49: #{tpu_custom_call.1} parent=39 // loop_footer
          %s263 = sadd.s32 1, %s259
        $region50: #{tpu_custom_call.1} parent=39 // loop_footer_branch
          %258 = sbr.rel target = $region46
        $region51: #{tpu_custom_call.1} parent=39 // loop_exit
          _
        %v281 = vld [vmem:[#allocation2] sm:$0xff]
        %v282 = vld [vmem:[#allocation2 + $0x8] sm:$0xff]
        %v283 = vld [vmem:[#allocation2 + $0x10] sm:$0xff]
        %v284 = vld [vmem:[#allocation2 + $0x18] sm:$0xff]
        %v285 = vadd.f32 %v281, %v264
        %v286 = vadd.f32 %v282, %v265
        %v287 = vadd.f32 %v283, %v266
        %v288 = vadd.f32 %v284, %v267
        %289 = vst [vmem:[#allocation2] sm:$0xff] %v285
        %290 = vst [vmem:[#allocation2 + $0x8] sm:$0xff] %v286
        %291 = vst [vmem:[#allocation2 + $0x10] sm:$0xff] %v287
        %292 = vst [vmem:[#allocation2 + $0x18] sm:$0xff] %v288
        // Predicated region
        $region52: #{tpu_custom_call.1} parent=39 // pred_check
          %p293 = pneg %p250
        $region53: #{tpu_custom_call.1} parent=39 // pred_check_branch
          %295 = sbr.rel (%p293) target = $region55
        $region54: #{tpu_custom_call.1} parent=39 // pred_region
          %v296 = vld [vmem:[#allocation2] sm:$0xff]
          %v297 = vld [vmem:[#allocation2 + $0x8] sm:$0xff]
          %v298 = vld [vmem:[#allocation2 + $0x10] sm:$0xff]
          %v299 = vld [vmem:[#allocation2 + $0x18] sm:$0xff]
          %300 = vadd.xlane.f32.xlu0 %v296
          %v301 = vpop.xlane.xlu0 %300
          %302 = vadd.xlane.f32.xlu0 %v297
          %v303 = vpop.xlane.xlu0 %302
          %304 = vadd.xlane.f32.xlu0 %v298
          %v305 = vpop.xlane.xlu0 %304
          %306 = vadd.xlane.f32.xlu0 %v299
          %v307 = vpop.xlane.xlu0 %306
          %v308 = vmul.f32 %v301, 0.00390625
          %v309 = vmul.f32 %v303, 0.00390625
          %v310 = vmul.f32 %v305, 0.00390625
          %v311 = vmul.f32 %v307, 0.00390625
          %v312 = vld [vmem:[%s1] sm:$0xff]
          %v313 = vld [vmem:[%s1 + $0x8] sm:$0xff]
          %v314 = vld [vmem:[%s1 + $0x10] sm:$0xff]
          %v315 = vld [vmem:[%s1 + $0x18] sm:$0xff]
          %v316 = vld [vmem:[%s1 + $0x20] sm:$0xff]
          %v317 = vld [vmem:[%s1 + $0x28] sm:$0xff]
          %v318 = vld [vmem:[%s1 + $0x30] sm:$0xff]
          %v319 = vld [vmem:[%s1 + $0x38] sm:$0xff]
          %v320 = vld [vmem:[%s1 + $0x40] sm:$0xff]
          %v321 = vld [vmem:[%s1 + $0x48] sm:$0xff]
          %v322 = vld [vmem:[%s1 + $0x50] sm:$0xff]
          %v323 = vld [vmem:[%s1 + $0x58] sm:$0xff]
          %v324 = vld [vmem:[%s1 + $0x60] sm:$0xff]
          %v325 = vld [vmem:[%s1 + $0x68] sm:$0xff]
          %v326 = vld [vmem:[%s1 + $0x70] sm:$0xff]
          %v327 = vld [vmem:[%s1 + $0x78] sm:$0xff]
          %v328 = vld [vmem:[%s1 + $0x80] sm:$0xff]
          %v329 = vld [vmem:[%s1 + $0x88] sm:$0xff]
          %v330 = vld [vmem:[%s1 + $0x90] sm:$0xff]
          %v331 = vld [vmem:[%s1 + $0x98] sm:$0xff]
          %v332 = vld [vmem:[%s1 + $0xa0] sm:$0xff]
          %v333 = vld [vmem:[%s1 + $0xa8] sm:$0xff]
          %v334 = vld [vmem:[%s1 + $0xb0] sm:$0xff]
          %v335 = vld [vmem:[%s1 + $0xb8] sm:$0xff]
          %v336 = vld [vmem:[%s1 + $0xc0] sm:$0xff]
          %v337 = vld [vmem:[%s1 + $0xc8] sm:$0xff]
          %v338 = vld [vmem:[%s1 + $0xd0] sm:$0xff]
          %v339 = vld [vmem:[%s1 + $0xd8] sm:$0xff]
          %v340 = vld [vmem:[%s1 + $0xe0] sm:$0xff]
          %v341 = vld [vmem:[%s1 + $0xe8] sm:$0xff]
          %v342 = vld [vmem:[%s1 + $0xf0] sm:$0xff]
          %v343 = vld [vmem:[%s1 + $0xf8] sm:$0xff]
          %v344 = vld [vmem:[%s2] sm:$0xff]
          %345 = vxpose.xlu0.b32.start [1/16] %v308, 128
          %346 = vxpose.xlu0.b32.cont [2/16] %v309, 128
          %347 = vxpose.xlu0.b32.cont [3/16] %v310, 128
          %348 = vxpose.xlu0.b32.cont [4/16] %v311, 128
          %349 = vxpose.xlu0.b32.cont [5/16] 0.0, 128
          %350 = vxpose.xlu0.b32.cont [6/16] 0.0, 128
          %351 = vxpose.xlu0.b32.cont [7/16] 0.0, 128
          %352 = vxpose.xlu0.b32.cont [8/16] 0.0, 128
          %353 = vxpose.xlu0.b32.cont [9/16] 0.0, 128
          %354 = vxpose.xlu0.b32.cont [10/16] 0.0, 128
          %355 = vxpose.xlu0.b32.cont [11/16] 0.0, 128
          %356 = vxpose.xlu0.b32.cont [12/16] 0.0, 128
          %357 = vxpose.xlu0.b32.cont [13/16] 0.0, 128
          %358 = vxpose.xlu0.b32.cont [14/16] 0.0, 128
          %359 = vxpose.xlu0.b32.cont [15/16] 0.0, 128
          %360 = vxpose.xlu0.b32.end [16/16] 0.0, 128
          %v361 = vpop.trf.xlu0
          %v362 = vpop.trf.xlu0
          %v363 = vpop.trf.xlu0
          %v364 = vpop.trf.xlu0
          %v365 = vpop.trf.xlu0
          %v366 = vpop.trf.xlu0
          %v367 = vpop.trf.xlu0
          %v368 = vpop.trf.xlu0
          %v369 = vpop.trf.xlu0
          %v370 = vpop.trf.xlu0
          %v371 = vpop.trf.xlu0
          %v372 = vpop.trf.xlu0
          %v373 = vpop.trf.xlu0
          %v374 = vpop.trf.xlu0
          %v375 = vpop.trf.xlu0
          %v376 = vpop.trf.xlu0
          %v378 = vlaneseq
          %v379 = vshrl.u32 %v378, 7
          %v380 = vsub.s32 0, %v379
          %v381 = vrot.slane %v344, %v380
          %v382 = vlaneseq
          %v383 = vshrl.u32 %v382, 7
          %v384 = vsub.s32 1, %v383
          %v385 = vrot.slane %v344, %v384
          %v386 = vlaneseq
          %v387 = vshrl.u32 %v386, 7
          %v388 = vsub.s32 2, %v387
          %v389 = vrot.slane %v344, %v388
          %v390 = vlaneseq
          %v391 = vshrl.u32 %v390, 7
          %v392 = vsub.s32 3, %v391
          %v393 = vrot.slane %v344, %v392
          %v394 = vlaneseq
          %v395 = vshrl.u32 %v394, 7
          %v396 = vsub.s32 4, %v395
          %v397 = vrot.slane %v344, %v396
          %v398 = vlaneseq
          %v399 = vshrl.u32 %v398, 7
          %v400 = vsub.s32 5, %v399
          %v401 = vrot.slane %v344, %v400
          %v402 = vlaneseq
          %v403 = vshrl.u32 %v402, 7
          %v404 = vsub.s32 6, %v403
          %v405 = vrot.slane %v344, %v404
          %v406 = vlaneseq
          %v407 = vshrl.u32 %v406, 7
          %v408 = vsub.s32 7, %v407
          %v409 = vrot.slane %v344, %v408
          %vm418 = vcmask 261120
          %v420 = vsel %vm418, %v361, 0
          %422 = vmatprep.subr.mxu0 %v313
          %423 = vmatpush1.msra.mxu0 %v312
          %424 = vmatprep.subr.mxu0 %v321
          %425 = vmatpush1.msra.mxu0 %v320
          %426 = vmatprep.subr.mxu0 %v329
          %427 = vmatpush1.msra.mxu0 %v328
          %428 = vmatprep.subr.mxu0 %v337
          %429 = vmatpush1.msra.mxu0 %v336
          %430 = vmatprep.subr.mxu0 0.0
          %431 = vmatpush1.msra.mxu0 0.0
          %432 = vmatprep.subr.mxu0 0.0
          %433 = vmatpush1.msra.mxu0 0.0
          %434 = vmatprep.subr.mxu0 0.0
          %435 = vmatpush1.msra.mxu0 0.0
          %436 = vmatprep.subr.mxu0 0.0
          %437 = vmatpush1.msra.mxu0 0.0
          %438 = vmatprep.subr.mxu0 0.0
          %439 = vmatpush1.msra.mxu0 0.0
          %440 = vmatprep.subr.mxu0 0.0
          %441 = vmatpush1.msra.mxu0 0.0
          %442 = vmatprep.subr.mxu0 0.0
          %443 = vmatpush1.msra.mxu0 0.0
          %444 = vmatprep.subr.mxu0 0.0
          %445 = vmatpush1.msra.mxu0 0.0
          %446 = vmatprep.subr.mxu0 0.0
          %447 = vmatpush1.msra.mxu0 0.0
          %448 = vmatprep.subr.mxu0 0.0
          %449 = vmatpush1.msra.mxu0 0.0
          %450 = vmatprep.subr.mxu0 0.0
          %451 = vmatpush1.msra.mxu0 0.0
          %452 = vmatprep.subr.mxu0 0.0
          %453 = vmatpush1.msra.mxu0 0.0
          %454 = vmatprep.subr.mxu0 0.0
          %455 = vmatpush1.msra.mxu0 0.0
          %456 = vmatprep.subr.mxu0 0.0
          %457 = vmatpush1.msra.mxu0 0.0
          %458 = vmatprep.subr.mxu0 0.0
          %459 = vmatpush1.msra.mxu0 0.0
          %460 = vmatprep.subr.mxu0 0.0
          %461 = vmatpush1.msra.mxu0 0.0
          %462 = vmatprep.subr.mxu0 0.0
          %463 = vmatpush1.msra.mxu0 0.0
          %464 = vmatprep.subr.mxu0 0.0
          %465 = vmatpush1.msra.mxu0 0.0
          %466 = vmatprep.subr.mxu0 0.0
          %467 = vmatpush1.msra.mxu0 0.0
          %468 = vmatprep.subr.mxu0 0.0
          %469 = vmatpush1.msra.mxu0 0.0
          %470 = vmatprep.subr.mxu0 0.0
          %471 = vmatpush1.msra.mxu0 0.0
          %472 = vmatprep.subr.mxu0 0.0
          %473 = vmatpush1.msra.mxu0 0.0
          %474 = vmatprep.subr.mxu0 0.0
          %475 = vmatpush1.msra.mxu0 0.0
          %476 = vmatprep.subr.mxu0 0.0
          %477 = vmatpush1.msra.mxu0 0.0
          %478 = vmatprep.subr.mxu0 0.0
          %479 = vmatpush1.msra.mxu0 0.0
          %480 = vmatprep.subr.mxu0 0.0
          %481 = vmatpush1.msra.mxu0 0.0
          %482 = vmatprep.subr.mxu0 0.0
          %483 = vmatpush1.msra.mxu0 0.0
          %484 = vmatprep.subr.mxu0 0.0
          %485 = vmatpush1.msra.mxu0 0.0
          %486 = vmatprep.mubr.f32.mxu0 0.0
          %487 = vmatmul.mubr.f32.gmra.mrb[0].mxu0 %v420
          %v488 = vpop.f32.mrb[0].mxu0
          %v489 = vadd.f32 %v381, %v488
          %v490 = vpop.f32.mrb[0].mxu0
          %v491 = vadd.f32 %v385, %v490
          %492 = vdwg.mxu0
          %493 = vmatprep.subr.mxu0 %v315
          %494 = vmatpush1.msra.mxu0 %v314
          %495 = vmatprep.subr.mxu0 %v323
          %496 = vmatpush1.msra.mxu0 %v322
          %497 = vmatprep.subr.mxu0 %v331
          %498 = vmatpush1.msra.mxu0 %v330
          %499 = vmatprep.subr.mxu0 %v339
          %500 = vmatpush1.msra.mxu0 %v338
          %501 = vmatprep.subr.mxu0 0.0
          %502 = vmatpush1.msra.mxu0 0.0
          %503 = vmatprep.subr.mxu0 0.0
          %504 = vmatpush1.msra.mxu0 0.0
          %505 = vmatprep.subr.mxu0 0.0
          %506 = vmatpush1.msra.mxu0 0.0
          %507 = vmatprep.subr.mxu0 0.0
          %508 = vmatpush1.msra.mxu0 0.0
          %509 = vmatprep.subr.mxu0 0.0
          %510 = vmatpush1.msra.mxu0 0.0
          %511 = vmatprep.subr.mxu0 0.0
          %512 = vmatpush1.msra.mxu0 0.0
          %513 = vmatprep.subr.mxu0 0.0
          %514 = vmatpush1.msra.mxu0 0.0
          %515 = vmatprep.subr.mxu0 0.0
          %516 = vmatpush1.msra.mxu0 0.0
          %517 = vmatprep.subr.mxu0 0.0
          %518 = vmatpush1.msra.mxu0 0.0
          %519 = vmatprep.subr.mxu0 0.0
          %520 = vmatpush1.msra.mxu0 0.0
          %521 = vmatprep.subr.mxu0 0.0
          %522 = vmatpush1.msra.mxu0 0.0
          %523 = vmatprep.subr.mxu0 0.0
          %524 = vmatpush1.msra.mxu0 0.0
          %525 = vmatprep.subr.mxu0 0.0
          %526 = vmatpush1.msra.mxu0 0.0
          %527 = vmatprep.subr.mxu0 0.0
          %528 = vmatpush1.msra.mxu0 0.0
          %529 = vmatprep.subr.mxu0 0.0
          %530 = vmatpush1.msra.mxu0 0.0
          %531 = vmatprep.subr.mxu0 0.0
          %532 = vmatpush1.msra.mxu0 0.0
          %533 = vmatprep.subr.mxu0 0.0
          %534 = vmatpush1.msra.mxu0 0.0
          %535 = vmatprep.subr.mxu0 0.0
          %536 = vmatpush1.msra.mxu0 0.0
          %537 = vmatprep.subr.mxu0 0.0
          %538 = vmatpush1.msra.mxu0 0.0
          %539 = vmatprep.subr.mxu0 0.0
          %540 = vmatpush1.msra.mxu0 0.0
          %541 = vmatprep.subr.mxu0 0.0
          %542 = vmatpush1.msra.mxu0 0.0
          %543 = vmatprep.subr.mxu0 0.0
          %544 = vmatpush1.msra.mxu0 0.0
          %545 = vmatprep.subr.mxu0 0.0
          %546 = vmatpush1.msra.mxu0 0.0
          %547 = vmatprep.subr.mxu0 0.0
          %548 = vmatpush1.msra.mxu0 0.0
          %549 = vmatprep.subr.mxu0 0.0
          %550 = vmatpush1.msra.mxu0 0.0
          %551 = vmatprep.subr.mxu0 0.0
          %552 = vmatpush1.msra.mxu0 0.0
          %553 = vmatprep.subr.mxu0 0.0
          %554 = vmatpush1.msra.mxu0 0.0
          %555 = vmatprep.subr.mxu0 0.0
          %556 = vmatpush1.msra.mxu0 0.0
          %557 = vmatprep.mubr.f32.mxu0 0.0
          %558 = vmatmul.mubr.f32.gmra.mrb[0].mxu0 %v420
          %v559 = vpop.f32.mrb[0].mxu0
          %v560 = vadd.f32 %v389, %v559
          %v561 = vpop.f32.mrb[0].mxu0
          %v562 = vadd.f32 %v393, %v561
          %563 = vdwg.mxu0
          %564 = vmatprep.subr.mxu0 %v317
          %565 = vmatpush1.msra.mxu0 %v316
          %566 = vmatprep.subr.mxu0 %v325
          %567 = vmatpush1.msra.mxu0 %v324
          %568 = vmatprep.subr.mxu0 %v333
          %569 = vmatpush1.msra.mxu0 %v332
          %570 = vmatprep.subr.mxu0 %v341
          %571 = vmatpush1.msra.mxu0 %v340
          %572 = vmatprep.subr.mxu0 0.0
          %573 = vmatpush1.msra.mxu0 0.0
          %574 = vmatprep.subr.mxu0 0.0
          %575 = vmatpush1.msra.mxu0 0.0
          %576 = vmatprep.subr.mxu0 0.0
          %577 = vmatpush1.msra.mxu0 0.0
          %578 = vmatprep.subr.mxu0 0.0
          %579 = vmatpush1.msra.mxu0 0.0
          %580 = vmatprep.subr.mxu0 0.0
          %581 = vmatpush1.msra.mxu0 0.0
          %582 = vmatprep.subr.mxu0 0.0
          %583 = vmatpush1.msra.mxu0 0.0
          %584 = vmatprep.subr.mxu0 0.0
          %585 = vmatpush1.msra.mxu0 0.0
          %586 = vmatprep.subr.mxu0 0.0
          %587 = vmatpush1.msra.mxu0 0.0
          %588 = vmatprep.subr.mxu0 0.0
          %589 = vmatpush1.msra.mxu0 0.0
          %590 = vmatprep.subr.mxu0 0.0
          %591 = vmatpush1.msra.mxu0 0.0
          %592 = vmatprep.subr.mxu0 0.0
          %593 = vmatpush1.msra.mxu0 0.0
          %594 = vmatprep.subr.mxu0 0.0
          %595 = vmatpush1.msra.mxu0 0.0
          %596 = vmatprep.subr.mxu0 0.0
          %597 = vmatpush1.msra.mxu0 0.0
          %598 = vmatprep.subr.mxu0 0.0
          %599 = vmatpush1.msra.mxu0 0.0
          %600 = vmatprep.subr.mxu0 0.0
          %601 = vmatpush1.msra.mxu0 0.0
          %602 = vmatprep.subr.mxu0 0.0
          %603 = vmatpush1.msra.mxu0 0.0
          %604 = vmatprep.subr.mxu0 0.0
          %605 = vmatpush1.msra.mxu0 0.0
          %606 = vmatprep.subr.mxu0 0.0
          %607 = vmatpush1.msra.mxu0 0.0
          %608 = vmatprep.subr.mxu0 0.0
          %609 = vmatpush1.msra.mxu0 0.0
          %610 = vmatprep.subr.mxu0 0.0
          %611 = vmatpush1.msra.mxu0 0.0
          %612 = vmatprep.subr.mxu0 0.0
          %613 = vmatpush1.msra.mxu0 0.0
          %614 = vmatprep.subr.mxu0 0.0
          %615 = vmatpush1.msra.mxu0 0.0
          %616 = vmatprep.subr.mxu0 0.0
          %617 = vmatpush1.msra.mxu0 0.0
          %618 = vmatprep.subr.mxu0 0.0
          %619 = vmatpush1.msra.mxu0 0.0
          %620 = vmatprep.subr.mxu0 0.0
          %621 = vmatpush1.msra.mxu0 0.0
          %622 = vmatprep.subr.mxu0 0.0
          %623 = vmatpush1.msra.mxu0 0.0
          %624 = vmatprep.subr.mxu0 0.0
          %625 = vmatpush1.msra.mxu0 0.0
          %626 = vmatprep.subr.mxu0 0.0
          %627 = vmatpush1.msra.mxu0 0.0
          %628 = vmatprep.mubr.f32.mxu0 0.0
          %629 = vmatmul.mubr.f32.gmra.mrb[0].mxu0 %v420
          %v630 = vpop.f32.mrb[0].mxu0
          %v631 = vadd.f32 %v397, %v630
          %v632 = vpop.f32.mrb[0].mxu0
          %v633 = vadd.f32 %v401, %v632
          %634 = vdwg.mxu0
          %635 = vmatprep.subr.mxu0 %v319
          %636 = vmatpush1.msra.mxu0 %v318
          %637 = vmatprep.subr.mxu0 %v327
          %638 = vmatpush1.msra.mxu0 %v326
          %639 = vmatprep.subr.mxu0 %v335
          %640 = vmatpush1.msra.mxu0 %v334
          %641 = vmatprep.subr.mxu0 %v343
          %642 = vmatpush1.msra.mxu0 %v342
          %643 = vmatprep.subr.mxu0 0.0
          %644 = vmatpush1.msra.mxu0 0.0
          %645 = vmatprep.subr.mxu0 0.0
          %646 = vmatpush1.msra.mxu0 0.0
          %647 = vmatprep.subr.mxu0 0.0
          %648 = vmatpush1.msra.mxu0 0.0
          %649 = vmatprep.subr.mxu0 0.0
          %650 = vmatpush1.msra.mxu0 0.0
          %651 = vmatprep.subr.mxu0 0.0
          %652 = vmatpush1.msra.mxu0 0.0
          %653 = vmatprep.subr.mxu0 0.0
          %654 = vmatpush1.msra.mxu0 0.0
          %655 = vmatprep.subr.mxu0 0.0
          %656 = vmatpush1.msra.mxu0 0.0
          %657 = vmatprep.subr.mxu0 0.0
          %658 = vmatpush1.msra.mxu0 0.0
          %659 = vmatprep.subr.mxu0 0.0
          %660 = vmatpush1.msra.mxu0 0.0
          %661 = vmatprep.subr.mxu0 0.0
          %662 = vmatpush1.msra.mxu0 0.0
          %663 = vmatprep.subr.mxu0 0.0
          %664 = vmatpush1.msra.mxu0 0.0
          %665 = vmatprep.subr.mxu0 0.0
          %666 = vmatpush1.msra.mxu0 0.0
          %667 = vmatprep.subr.mxu0 0.0
          %668 = vmatpush1.msra.mxu0 0.0
          %669 = vmatprep.subr.mxu0 0.0
          %670 = vmatpush1.msra.mxu0 0.0
          %671 = vmatprep.subr.mxu0 0.0
          %672 = vmatpush1.msra.mxu0 0.0
          %673 = vmatprep.subr.mxu0 0.0
          %674 = vmatpush1.msra.mxu0 0.0
          %675 = vmatprep.subr.mxu0 0.0
          %676 = vmatpush1.msra.mxu0 0.0
          %677 = vmatprep.subr.mxu0 0.0
          %678 = vmatpush1.msra.mxu0 0.0
          %679 = vmatprep.subr.mxu0 0.0
          %680 = vmatpush1.msra.mxu0 0.0
          %681 = vmatprep.subr.mxu0 0.0
          %682 = vmatpush1.msra.mxu0 0.0
          %683 = vmatprep.subr.mxu0 0.0
          %684 = vmatpush1.msra.mxu0 0.0
          %685 = vmatprep.subr.mxu0 0.0
          %686 = vmatpush1.msra.mxu0 0.0
          %687 = vmatprep.subr.mxu0 0.0
          %688 = vmatpush1.msra.mxu0 0.0
          %689 = vmatprep.subr.mxu0 0.0
          %690 = vmatpush1.msra.mxu0 0.0
          %691 = vmatprep.subr.mxu0 0.0
          %692 = vmatpush1.msra.mxu0 0.0
          %693 = vmatprep.subr.mxu0 0.0
          %694 = vmatpush1.msra.mxu0 0.0
          %695 = vmatprep.subr.mxu0 0.0
          %696 = vmatpush1.msra.mxu0 0.0
          %697 = vmatprep.subr.mxu0 0.0
          %698 = vmatpush1.msra.mxu0 0.0
          %699 = vmatprep.mubr.f32.mxu0 0.0
          %700 = vmatmul.mubr.f32.gmra.mrb[0].mxu0 %v420
          %v701 = vpop.f32.mrb[0].mxu0
          %v702 = vadd.f32 %v405, %v701
          %v703 = vpop.f32.mrb[0].mxu0
          %v704 = vadd.f32 %v409, %v703
          %705 = vdwg.mxu0
          %vm706 = vcmp.ge.f32.partialorder %v489, 0.0
          %vm707 = vcmp.ge.f32.partialorder %v491, 0.0
          %vm708 = vcmp.ge.f32.partialorder %v560, 0.0
          %vm709 = vcmp.ge.f32.partialorder %v562, 0.0
          %vm710 = vcmp.ge.f32.partialorder %v631, 0.0
          %vm711 = vcmp.ge.f32.partialorder %v633, 0.0
          %vm712 = vcmp.ge.f32.partialorder %v702, 0.0
          %vm713 = vcmp.ge.f32.partialorder %v704, 0.0
          %v714 = vmul.f32 %v489, 0.01
          %v715 = vmul.f32 %v491, 0.01
          %v716 = vmul.f32 %v560, 0.01
          %v717 = vmul.f32 %v562, 0.01
          %v718 = vmul.f32 %v631, 0.01
          %v719 = vmul.f32 %v633, 0.01
          %v720 = vmul.f32 %v702, 0.01
          %v721 = vmul.f32 %v704, 0.01
          %v722 = vsel %vm706, %v489, %v714
          %v723 = vsel %vm707, %v491, %v715
          %v724 = vsel %vm708, %v560, %v716
          %v725 = vsel %vm709, %v562, %v717
          %v726 = vsel %vm710, %v631, %v718
          %v727 = vsel %vm711, %v633, %v719
          %v728 = vsel %vm712, %v702, %v720
          %v729 = vsel %vm713, %v704, %v721
          %v730 = vld [vmem:[%s3] sm:$0xff]
          %v731 = vld [vmem:[%s3 + $0x8] sm:$0xff]
          %v732 = vld [vmem:[%s3 + $0x10] sm:$0xff]
          %v733 = vld [vmem:[%s3 + $0x18] sm:$0xff]
          %v734 = vld [vmem:[%s3 + $0x20] sm:$0xff]
          %v735 = vld [vmem:[%s3 + $0x28] sm:$0xff]
          %v736 = vld [vmem:[%s3 + $0x30] sm:$0xff]
          %v737 = vld [vmem:[%s3 + $0x38] sm:$0xff]
          %v738 = vld [vmem:[%s3 + $0x40] sm:$0xff]
          %v739 = vld [vmem:[%s3 + $0x48] sm:$0xff]
          %v740 = vld [vmem:[%s3 + $0x50] sm:$0xff]
          %v741 = vld [vmem:[%s3 + $0x58] sm:$0xff]
          %v742 = vld [vmem:[%s3 + $0x60] sm:$0xff]
          %v743 = vld [vmem:[%s3 + $0x68] sm:$0xff]
          %v744 = vld [vmem:[%s3 + $0x70] sm:$0xff]
          %v745 = vld [vmem:[%s3 + $0x78] sm:$0xff]
          %v746 = vld [vmem:[%s3 + $0x80] sm:$0xff]
          %v747 = vld [vmem:[%s3 + $0x88] sm:$0xff]
          %v748 = vld [vmem:[%s3 + $0x90] sm:$0xff]
          %v749 = vld [vmem:[%s3 + $0x98] sm:$0xff]
          %v750 = vld [vmem:[%s3 + $0xa0] sm:$0xff]
          %v751 = vld [vmem:[%s3 + $0xa8] sm:$0xff]
          %v752 = vld [vmem:[%s3 + $0xb0] sm:$0xff]
          %v753 = vld [vmem:[%s3 + $0xb8] sm:$0xff]
          %v754 = vld [vmem:[%s3 + $0xc0] sm:$0xff]
          %v755 = vld [vmem:[%s3 + $0xc8] sm:$0xff]
          %v756 = vld [vmem:[%s3 + $0xd0] sm:$0xff]
          %v757 = vld [vmem:[%s3 + $0xd8] sm:$0xff]
          %v758 = vld [vmem:[%s3 + $0xe0] sm:$0xff]
          %v759 = vld [vmem:[%s3 + $0xe8] sm:$0xff]
          %v760 = vld [vmem:[%s3 + $0xf0] sm:$0xff]
          %v761 = vld [vmem:[%s3 + $0xf8] sm:$0xff]
          %v762 = vld [vmem:[%s3 + $0x100] sm:$0xff]
          %v763 = vld [vmem:[%s3 + $0x108] sm:$0xff]
          %v764 = vld [vmem:[%s3 + $0x110] sm:$0xff]
          %v765 = vld [vmem:[%s3 + $0x118] sm:$0xff]
          %v766 = vld [vmem:[%s3 + $0x120] sm:$0xff]
          %v767 = vld [vmem:[%s3 + $0x128] sm:$0xff]
          %v768 = vld [vmem:[%s3 + $0x130] sm:$0xff]
          %v769 = vld [vmem:[%s3 + $0x138] sm:$0xff]
          %v770 = vld [vmem:[%s3 + $0x140] sm:$0xff]
          %v771 = vld [vmem:[%s3 + $0x148] sm:$0xff]
          %v772 = vld [vmem:[%s3 + $0x150] sm:$0xff]
          %v773 = vld [vmem:[%s3 + $0x158] sm:$0xff]
          %v774 = vld [vmem:[%s3 + $0x160] sm:$0xff]
          %v775 = vld [vmem:[%s3 + $0x168] sm:$0xff]
          %v776 = vld [vmem:[%s3 + $0x170] sm:$0xff]
          %v777 = vld [vmem:[%s3 + $0x178] sm:$0xff]
          %v778 = vld [vmem:[%s3 + $0x180] sm:$0xff]
          %v779 = vld [vmem:[%s3 + $0x188] sm:$0xff]
          %v780 = vld [vmem:[%s3 + $0x190] sm:$0xff]
          %v781 = vld [vmem:[%s3 + $0x198] sm:$0xff]
          %v782 = vld [vmem:[%s3 + $0x1a0] sm:$0xff]
          %v783 = vld [vmem:[%s3 + $0x1a8] sm:$0xff]
          %v784 = vld [vmem:[%s3 + $0x1b0] sm:$0xff]
          %v785 = vld [vmem:[%s3 + $0x1b8] sm:$0xff]
          %v786 = vld [vmem:[%s3 + $0x1c0] sm:$0xff]
          %v787 = vld [vmem:[%s3 + $0x1c8] sm:$0xff]
          %v788 = vld [vmem:[%s3 + $0x1d0] sm:$0xff]
          %v789 = vld [vmem:[%s3 + $0x1d8] sm:$0xff]
          %v790 = vld [vmem:[%s3 + $0x1e0] sm:$0xff]
          %v791 = vld [vmem:[%s3 + $0x1e8] sm:$0xff]
          %v792 = vld [vmem:[%s3 + $0x1f0] sm:$0xff]
          %v793 = vld [vmem:[%s3 + $0x1f8] sm:$0xff]
          %v794 = vld [vmem:[%s3 + $0x200] sm:$0xff]
          %v795 = vld [vmem:[%s3 + $0x208] sm:$0xff]
          %v796 = vld [vmem:[%s3 + $0x210] sm:$0xff]
          %v797 = vld [vmem:[%s3 + $0x218] sm:$0xff]
          %v798 = vld [vmem:[%s3 + $0x220] sm:$0xff]
          %v799 = vld [vmem:[%s3 + $0x228] sm:$0xff]
          %v800 = vld [vmem:[%s3 + $0x230] sm:$0xff]
          %v801 = vld [vmem:[%s3 + $0x238] sm:$0xff]
          %v802 = vld [vmem:[%s3 + $0x240] sm:$0xff]
          %v803 = vld [vmem:[%s3 + $0x248] sm:$0xff]
          %v804 = vld [vmem:[%s3 + $0x250] sm:$0xff]
          %v805 = vld [vmem:[%s3 + $0x258] sm:$0xff]
          %v806 = vld [vmem:[%s3 + $0x260] sm:$0xff]
          %v807 = vld [vmem:[%s3 + $0x268] sm:$0xff]
          %v808 = vld [vmem:[%s3 + $0x270] sm:$0xff]
          %v809 = vld [vmem:[%s3 + $0x278] sm:$0xff]
          %v810 = vld [vmem:[%s3 + $0x280] sm:$0xff]
          %v811 = vld [vmem:[%s3 + $0x288] sm:$0xff]
          %v812 = vld [vmem:[%s3 + $0x290] sm:$0xff]
          %v813 = vld [vmem:[%s3 + $0x298] sm:$0xff]
          %v814 = vld [vmem:[%s3 + $0x2a0] sm:$0xff]
          %v815 = vld [vmem:[%s3 + $0x2a8] sm:$0xff]
          %v816 = vld [vmem:[%s3 + $0x2b0] sm:$0xff]
          %v817 = vld [vmem:[%s3 + $0x2b8] sm:$0xff]
          %v818 = vld [vmem:[%s3 + $0x2c0] sm:$0xff]
          %v819 = vld [vmem:[%s3 + $0x2c8] sm:$0xff]
          %v820 = vld [vmem:[%s3 + $0x2d0] sm:$0xff]
          %v821 = vld [vmem:[%s3 + $0x2d8] sm:$0xff]
          %v822 = vld [vmem:[%s3 + $0x2e0] sm:$0xff]
          %v823 = vld [vmem:[%s3 + $0x2e8] sm:$0xff]
          %v824 = vld [vmem:[%s3 + $0x2f0] sm:$0xff]
          %v825 = vld [vmem:[%s3 + $0x2f8] sm:$0xff]
          %v826 = vld [vmem:[%s3 + $0x300] sm:$0xff]
          %v827 = vld [vmem:[%s3 + $0x308] sm:$0xff]
          %v828 = vld [vmem:[%s3 + $0x310] sm:$0xff]
          %v829 = vld [vmem:[%s3 + $0x318] sm:$0xff]
          %v830 = vld [vmem:[%s3 + $0x320] sm:$0xff]
          %v831 = vld [vmem:[%s3 + $0x328] sm:$0xff]
          %v832 = vld [vmem:[%s3 + $0x330] sm:$0xff]
          %v833 = vld [vmem:[%s3 + $0x338] sm:$0xff]
          %v834 = vld [vmem:[%s3 + $0x340] sm:$0xff]
          %v835 = vld [vmem:[%s3 + $0x348] sm:$0xff]
          %v836 = vld [vmem:[%s3 + $0x350] sm:$0xff]
          %v837 = vld [vmem:[%s3 + $0x358] sm:$0xff]
          %v838 = vld [vmem:[%s3 + $0x360] sm:$0xff]
          %v839 = vld [vmem:[%s3 + $0x368] sm:$0xff]
          %v840 = vld [vmem:[%s3 + $0x370] sm:$0xff]
          %v841 = vld [vmem:[%s3 + $0x378] sm:$0xff]
          %v842 = vld [vmem:[%s3 + $0x380] sm:$0xff]
          %v843 = vld [vmem:[%s3 + $0x388] sm:$0xff]
          %v844 = vld [vmem:[%s3 + $0x390] sm:$0xff]
          %v845 = vld [vmem:[%s3 + $0x398] sm:$0xff]
          %v846 = vld [vmem:[%s3 + $0x3a0] sm:$0xff]
          %v847 = vld [vmem:[%s3 + $0x3a8] sm:$0xff]
          %v848 = vld [vmem:[%s3 + $0x3b0] sm:$0xff]
          %v849 = vld [vmem:[%s3 + $0x3b8] sm:$0xff]
          %v850 = vld [vmem:[%s3 + $0x3c0] sm:$0xff]
          %v851 = vld [vmem:[%s3 + $0x3c8] sm:$0xff]
          %v852 = vld [vmem:[%s3 + $0x3d0] sm:$0xff]
          %v853 = vld [vmem:[%s3 + $0x3d8] sm:$0xff]
          %v854 = vld [vmem:[%s3 + $0x3e0] sm:$0xff]
          %v855 = vld [vmem:[%s3 + $0x3e8] sm:$0xff]
          %v856 = vld [vmem:[%s3 + $0x3f0] sm:$0xff]
          %v857 = vld [vmem:[%s3 + $0x3f8] sm:$0xff]
          %v858 = vld [vmem:[%s4] sm:$0x1]
          %859 = vmatprep.subr.mxu0 0.0
          %860 = vmatpush1.msra.mxu0 %v730
          %861 = vmatprep.subr.mxu0 0.0
          %862 = vmatpush1.msra.mxu0 %v731
          %863 = vmatprep.subr.mxu0 0.0
          %864 = vmatpush1.msra.mxu0 %v732
          %865 = vmatprep.subr.mxu0 0.0
          %866 = vmatpush1.msra.mxu0 %v733
          %867 = vmatprep.subr.mxu0 0.0
          %868 = vmatpush1.msra.mxu0 %v734
          %869 = vmatprep.subr.mxu0 0.0
          %870 = vmatpush1.msra.mxu0 %v735
          %871 = vmatprep.subr.mxu0 0.0
          %872 = vmatpush1.msra.mxu0 %v736
          %873 = vmatprep.subr.mxu0 0.0
          %874 = vmatpush1.msra.mxu0 %v737
          %875 = vmatprep.subr.mxu0 0.0
          %876 = vmatpush1.msra.mxu0 %v738
          %877 = vmatprep.subr.mxu0 0.0
          %878 = vmatpush1.msra.mxu0 %v739
          %879 = vmatprep.subr.mxu0 0.0
          %880 = vmatpush1.msra.mxu0 %v740
          %881 = vmatprep.subr.mxu0 0.0
          %882 = vmatpush1.msra.mxu0 %v741
          %883 = vmatprep.subr.mxu0 0.0
          %884 = vmatpush1.msra.mxu0 %v742
          %885 = vmatprep.subr.mxu0 0.0
          %886 = vmatpush1.msra.mxu0 %v743
          %887 = vmatprep.subr.mxu0 0.0
          %888 = vmatpush1.msra.mxu0 %v744
          %889 = vmatprep.subr.mxu0 0.0
          %890 = vmatpush1.msra.mxu0 %v745
          %891 = vmatprep.subr.mxu0 0.0
          %892 = vmatpush1.msra.mxu0 %v746
          %893 = vmatprep.subr.mxu0 0.0
          %894 = vmatpush1.msra.mxu0 %v747
          %895 = vmatprep.subr.mxu0 0.0
          %896 = vmatpush1.msra.mxu0 %v748
          %897 = vmatprep.subr.mxu0 0.0
          %898 = vmatpush1.msra.mxu0 %v749
          %899 = vmatprep.subr.mxu0 0.0
          %900 = vmatpush1.msra.mxu0 %v750
          %901 = vmatprep.subr.mxu0 0.0
          %902 = vmatpush1.msra.mxu0 %v751
          %903 = vmatprep.subr.mxu0 0.0
          %904 = vmatpush1.msra.mxu0 %v752
          %905 = vmatprep.subr.mxu0 0.0
          %906 = vmatpush1.msra.mxu0 %v753
          %907 = vmatprep.subr.mxu0 0.0
          %908 = vmatpush1.msra.mxu0 %v754
          %909 = vmatprep.subr.mxu0 0.0
          %910 = vmatpush1.msra.mxu0 %v755
          %911 = vmatprep.subr.mxu0 0.0
          %912 = vmatpush1.msra.mxu0 %v756
          %913 = vmatprep.subr.mxu0 0.0
          %914 = vmatpush1.msra.mxu0 %v757
          %915 = vmatprep.subr.mxu0 0.0
          %916 = vmatpush1.msra.mxu0 %v758
          %917 = vmatprep.subr.mxu0 0.0
          %918 = vmatpush1.msra.mxu0 %v759
          %919 = vmatprep.subr.mxu0 0.0
          %920 = vmatpush1.msra.mxu0 %v760
          %921 = vmatprep.subr.mxu0 0.0
          %922 = vmatpush1.msra.mxu0 %v761
          %923 = vmatprep.mubr.f32.mxu0 %v723
          %924 = vmatmul.mubr.f32.gmra.mrb[0].mxu0 %v722
          %v925 = vpop.f32.mrb[0].mxu0
          %v926 = vadd.f32 %v858, %v925
          %v927 = vpop.f32.mrb[0].mxu0
          %928 = vdwg.mxu0
          %929 = vmatprep.subr.mxu0 0.0
          %930 = vmatpush1.msra.mxu0 %v762
          %931 = vmatprep.subr.mxu0 0.0
          %932 = vmatpush1.msra.mxu0 %v763
          %933 = vmatprep.subr.mxu0 0.0
          %934 = vmatpush1.msra.mxu0 %v764
          %935 = vmatprep.subr.mxu0 0.0
          %936 = vmatpush1.msra.mxu0 %v765
          %937 = vmatprep.subr.mxu0 0.0
          %938 = vmatpush1.msra.mxu0 %v766
          %939 = vmatprep.subr.mxu0 0.0
          %940 = vmatpush1.msra.mxu0 %v767
          %941 = vmatprep.subr.mxu0 0.0
          %942 = vmatpush1.msra.mxu0 %v768
          %943 = vmatprep.subr.mxu0 0.0
          %944 = vmatpush1.msra.mxu0 %v769
          %945 = vmatprep.subr.mxu0 0.0
          %946 = vmatpush1.msra.mxu0 %v770
          %947 = vmatprep.subr.mxu0 0.0
          %948 = vmatpush1.msra.mxu0 %v771
          %949 = vmatprep.subr.mxu0 0.0
          %950 = vmatpush1.msra.mxu0 %v772
          %951 = vmatprep.subr.mxu0 0.0
          %952 = vmatpush1.msra.mxu0 %v773
          %953 = vmatprep.subr.mxu0 0.0
          %954 = vmatpush1.msra.mxu0 %v774
          %955 = vmatprep.subr.mxu0 0.0
          %956 = vmatpush1.msra.mxu0 %v775
          %957 = vmatprep.subr.mxu0 0.0
          %958 = vmatpush1.msra.mxu0 %v776
          %959 = vmatprep.subr.mxu0 0.0
          %960 = vmatpush1.msra.mxu0 %v777
          %961 = vmatprep.subr.mxu0 0.0
          %962 = vmatpush1.msra.mxu0 %v778
          %963 = vmatprep.subr.mxu0 0.0
          %964 = vmatpush1.msra.mxu0 %v779
          %965 = vmatprep.subr.mxu0 0.0
          %966 = vmatpush1.msra.mxu0 %v780
          %967 = vmatprep.subr.mxu0 0.0
          %968 = vmatpush1.msra.mxu0 %v781
          %969 = vmatprep.subr.mxu0 0.0
          %970 = vmatpush1.msra.mxu0 %v782
          %971 = vmatprep.subr.mxu0 0.0
          %972 = vmatpush1.msra.mxu0 %v783
          %973 = vmatprep.subr.mxu0 0.0
          %974 = vmatpush1.msra.mxu0 %v784
          %975 = vmatprep.subr.mxu0 0.0
          %976 = vmatpush1.msra.mxu0 %v785
          %977 = vmatprep.subr.mxu0 0.0
          %978 = vmatpush1.msra.mxu0 %v786
          %979 = vmatprep.subr.mxu0 0.0
          %980 = vmatpush1.msra.mxu0 %v787
          %981 = vmatprep.subr.mxu0 0.0
          %982 = vmatpush1.msra.mxu0 %v788
          %983 = vmatprep.subr.mxu0 0.0
          %984 = vmatpush1.msra.mxu0 %v789
          %985 = vmatprep.subr.mxu0 0.0
          %986 = vmatpush1.msra.mxu0 %v790
          %987 = vmatprep.subr.mxu0 0.0
          %988 = vmatpush1.msra.mxu0 %v791
          %989 = vmatprep.subr.mxu0 0.0
          %990 = vmatpush1.msra.mxu0 %v792
          %991 = vmatprep.subr.mxu0 0.0
          %992 = vmatpush1.msra.mxu0 %v793
          %993 = vmatprep.mubr.f32.mxu0 %v725
          %994 = vmatmul.mubr.f32.gmra.mrb[0].mxu0 %v724
          %v995 = vpop.f32.mrb[0].mxu0
          %v996 = vadd.f32 %v926, %v995
          %v997 = vpop.f32.mrb[0].mxu0
          %998 = vdwg.mxu0
          %999 = vmatprep.subr.mxu0 0.0
          %1000 = vmatpush1.msra.mxu0 %v794
          %1001 = vmatprep.subr.mxu0 0.0
          %1002 = vmatpush1.msra.mxu0 %v795
          %1003 = vmatprep.subr.mxu0 0.0
          %1004 = vmatpush1.msra.mxu0 %v796
          %1005 = vmatprep.subr.mxu0 0.0
          %1006 = vmatpush1.msra.mxu0 %v797
          %1007 = vmatprep.subr.mxu0 0.0
          %1008 = vmatpush1.msra.mxu0 %v798
          %1009 = vmatprep.subr.mxu0 0.0
          %1010 = vmatpush1.msra.mxu0 %v799
          %1011 = vmatprep.subr.mxu0 0.0
          %1012 = vmatpush1.msra.mxu0 %v800
          %1013 = vmatprep.subr.mxu0 0.0
          %1014 = vmatpush1.msra.mxu0 %v801
          %1015 = vmatprep.subr.mxu0 0.0
          %1016 = vmatpush1.msra.mxu0 %v802
          %1017 = vmatprep.subr.mxu0 0.0
          %1018 = vmatpush1.msra.mxu0 %v803
          %1019 = vmatprep.subr.mxu0 0.0
          %1020 = vmatpush1.msra.mxu0 %v804
          %1021 = vmatprep.subr.mxu0 0.0
          %1022 = vmatpush1.msra.mxu0 %v805
          %1023 = vmatprep.subr.mxu0 0.0
          %1024 = vmatpush1.msra.mxu0 %v806
          %1025 = vmatprep.subr.mxu0 0.0
          %1026 = vmatpush1.msra.mxu0 %v807
          %1027 = vmatprep.subr.mxu0 0.0
          %1028 = vmatpush1.msra.mxu0 %v808
          %1029 = vmatprep.subr.mxu0 0.0
          %1030 = vmatpush1.msra.mxu0 %v809
          %1031 = vmatprep.subr.mxu0 0.0
          %1032 = vmatpush1.msra.mxu0 %v810
          %1033 = vmatprep.subr.mxu0 0.0
          %1034 = vmatpush1.msra.mxu0 %v811
          %1035 = vmatprep.subr.mxu0 0.0
          %1036 = vmatpush1.msra.mxu0 %v812
          %1037 = vmatprep.subr.mxu0 0.0
          %1038 = vmatpush1.msra.mxu0 %v813
          %1039 = vmatprep.subr.mxu0 0.0
          %1040 = vmatpush1.msra.mxu0 %v814
          %1041 = vmatprep.subr.mxu0 0.0
          %1042 = vmatpush1.msra.mxu0 %v815
          %1043 = vmatprep.subr.mxu0 0.0
          %1044 = vmatpush1.msra.mxu0 %v816
          %1045 = vmatprep.subr.mxu0 0.0
          %1046 = vmatpush1.msra.mxu0 %v817
          %1047 = vmatprep.subr.mxu0 0.0
          %1048 = vmatpush1.msra.mxu0 %v818
          %1049 = vmatprep.subr.mxu0 0.0
          %1050 = vmatpush1.msra.mxu0 %v819
          %1051 = vmatprep.subr.mxu0 0.0
          %1052 = vmatpush1.msra.mxu0 %v820
          %1053 = vmatprep.subr.mxu0 0.0
          %1054 = vmatpush1.msra.mxu0 %v821
          %1055 = vmatprep.subr.mxu0 0.0
          %1056 = vmatpush1.msra.mxu0 %v822
          %1057 = vmatprep.subr.mxu0 0.0
          %1058 = vmatpush1.msra.mxu0 %v823
          %1059 = vmatprep.subr.mxu0 0.0
          %1060 = vmatpush1.msra.mxu0 %v824
          %1061 = vmatprep.subr.mxu0 0.0
          %1062 = vmatpush1.msra.mxu0 %v825
          %1063 = vmatprep.mubr.f32.mxu0 %v727
          %1064 = vmatmul.mubr.f32.gmra.mrb[0].mxu0 %v726
          %v1065 = vpop.f32.mrb[0].mxu0
          %v1066 = vadd.f32 %v996, %v1065
          %v1067 = vpop.f32.mrb[0].mxu0
          %1068 = vdwg.mxu0
          %1069 = vmatprep.subr.mxu0 0.0
          %1070 = vmatpush1.msra.mxu0 %v826
          %1071 = vmatprep.subr.mxu0 0.0
          %1072 = vmatpush1.msra.mxu0 %v827
          %1073 = vmatprep.subr.mxu0 0.0
          %1074 = vmatpush1.msra.mxu0 %v828
          %1075 = vmatprep.subr.mxu0 0.0
          %1076 = vmatpush1.msra.mxu0 %v829
          %1077 = vmatprep.subr.mxu0 0.0
          %1078 = vmatpush1.msra.mxu0 %v830
          %1079 = vmatprep.subr.mxu0 0.0
          %1080 = vmatpush1.msra.mxu0 %v831
          %1081 = vmatprep.subr.mxu0 0.0
          %1082 = vmatpush1.msra.mxu0 %v832
          %1083 = vmatprep.subr.mxu0 0.0
          %1084 = vmatpush1.msra.mxu0 %v833
          %1085 = vmatprep.subr.mxu0 0.0
          %1086 = vmatpush1.msra.mxu0 %v834
          %1087 = vmatprep.subr.mxu0 0.0
          %1088 = vmatpush1.msra.mxu0 %v835
          %1089 = vmatprep.subr.mxu0 0.0
          %1090 = vmatpush1.msra.mxu0 %v836
          %1091 = vmatprep.subr.mxu0 0.0
          %1092 = vmatpush1.msra.mxu0 %v837
          %1093 = vmatprep.subr.mxu0 0.0
          %1094 = vmatpush1.msra.mxu0 %v838
          %1095 = vmatprep.subr.mxu0 0.0
          %1096 = vmatpush1.msra.mxu0 %v839
          %1097 = vmatprep.subr.mxu0 0.0
          %1098 = vmatpush1.msra.mxu0 %v840
          %1099 = vmatprep.subr.mxu0 0.0
          %1100 = vmatpush1.msra.mxu0 %v841
          %1101 = vmatprep.subr.mxu0 0.0
          %1102 = vmatpush1.msra.mxu0 %v842
          %1103 = vmatprep.subr.mxu0 0.0
          %1104 = vmatpush1.msra.mxu0 %v843
          %1105 = vmatprep.subr.mxu0 0.0
          %1106 = vmatpush1.msra.mxu0 %v844
          %1107 = vmatprep.subr.mxu0 0.0
          %1108 = vmatpush1.msra.mxu0 %v845
          %1109 = vmatprep.subr.mxu0 0.0
          %1110 = vmatpush1.msra.mxu0 %v846
          %1111 = vmatprep.subr.mxu0 0.0
          %1112 = vmatpush1.msra.mxu0 %v847
          %1113 = vmatprep.subr.mxu0 0.0
          %1114 = vmatpush1.msra.mxu0 %v848
          %1115 = vmatprep.subr.mxu0 0.0
          %1116 = vmatpush1.msra.mxu0 %v849
          %1117 = vmatprep.subr.mxu0 0.0
          %1118 = vmatpush1.msra.mxu0 %v850
          %1119 = vmatprep.subr.mxu0 0.0
          %1120 = vmatpush1.msra.mxu0 %v851
          %1121 = vmatprep.subr.mxu0 0.0
          %1122 = vmatpush1.msra.mxu0 %v852
          %1123 = vmatprep.subr.mxu0 0.0
          %1124 = vmatpush1.msra.mxu0 %v853
          %1125 = vmatprep.subr.mxu0 0.0
          %1126 = vmatpush1.msra.mxu0 %v854
          %1127 = vmatprep.subr.mxu0 0.0
          %1128 = vmatpush1.msra.mxu0 %v855
          %1129 = vmatprep.subr.mxu0 0.0
          %1130 = vmatpush1.msra.mxu0 %v856
          %1131 = vmatprep.subr.mxu0 0.0
          %1132 = vmatpush1.msra.mxu0 %v857
          %1133 = vmatprep.mubr.f32.mxu0 %v729
          %1134 = vmatmul.mubr.f32.gmra.mrb[0].mxu0 %v728
          %v1135 = vpop.f32.mrb[0].mxu0
          %v1136 = vadd.f32 %v1066, %v1135
          %v1137 = vpop.f32.mrb[0].mxu0
          %1138 = vdwg.mxu0
          %vm1139 = vcmp.ge.f32.partialorder %v1136, 0.0
          %v1140 = vmul.f32 %v1136, 0.01
          %v1141 = vsel %vm1139, %v1136, %v1140
          %vm1142 = vcmask 73728
          %1143 = vst.msk [vmem:[%s239] sm:$0x1] %vm1142, %v1141
        $region55: #{tpu_custom_call.1} parent=39 // pred_fallthru
          _
        %s1144 = sand.u32 %s151, 1
        %s1145 = scalar_lea.sflag [#allocation4], %s1144
        %s1146 = sand.u32 %s151, 1
        %s1147 = scalar_lea.vmem [#allocation3], %s1146
        // Predicated region
        $region56: #{tpu_custom_call.1} parent=39 // pred_check
          %p1148 = pneg %p161
        $region57: #{tpu_custom_call.1} parent=39 // pred_check_branch
          %1150 = sbr.rel (%p1148) target = $region59
        $region58: #{tpu_custom_call.1} parent=39 // pred_region
          %s1152 = ssub.s32 16, 16
          %1153 = vsyncadd %s1145, %s1152
          %s1154 = smul.addr %s23, 16
          %s1155 = scalar_lea.hbm %s5, %s1154
          %s1157 = sshll.u32 %s1147, 4
          %s1158 = int_to_ptr.vmem [resolvable:$true] %s1157
          %1160 = dma.vmem_to_hbm [thread:$0]  %s1158, 16, %s1155, %s1145
        $region59: #{tpu_custom_call.1} parent=39 // pred_fallthru
          _
      $region40: #{tpu_custom_call.1} parent=5 // pred_fallthru
        _
      %p1161 = scmp.le.s32.totalorder 2, %s14
      // Predicated region
      $region60: #{tpu_custom_call.1} parent=5 // pred_check
        %p1162 = pneg %p1161
      $region61: #{tpu_custom_call.1} parent=5 // pred_check_branch
        %1164 = sbr.rel (%p1162) target = $region63
      $region62: #{tpu_custom_call.1} parent=5 // pred_region
        %s1165 = ssub.s32 %s14, 2
        // Predicated region
        $region64: #{tpu_custom_call.1} parent=62 // pred_check
          %p1166 = pneg %p167
        $region65: #{tpu_custom_call.1} parent=62 // pred_check_branch
          %1168 = sbr.rel (%p1166) target = $region67
        $region66: #{tpu_custom_call.1} parent=62 // pred_region
          %s1169 = sand.u32 %s152, 1
          %s1170 = scalar_lea.sflag [#allocation4], %s1169
          %s1171 = sand.u32 %s152, 1
          %s1172 = scalar_lea.vmem [#allocation3], %s1171
          %1173 = dma.done %s1170, 16
        $region67: #{tpu_custom_call.1} parent=62 // pred_fallthru
          _
      $region63: #{tpu_custom_call.1} parent=5 // pred_fallthru
        _
    $region6: #{tpu_custom_call.1} parent=1 // loop_footer
      %s18 = sadd.s32 1, %s14
    $region7: #{tpu_custom_call.1} parent=1 // loop_footer_branch
      %13 = sbr.rel target = $region3
    $region8: #{tpu_custom_call.1} parent=1 // loop_exit
      _
    %1174 = vsyncpa [#allocation4], 1
    %s1175 = scalar_lea.sflag [#allocation4], 1
    %1176 = vsyncpa %s1175, 1

</llo_original>
